<compile_context>
chip_gen: v7x
topology: tpu7x:2x2x1
jax: 0.10.0
libtpu: 0.0.40
codegen_flags: <defaults>
</compile_context>

<pallas_src>
import jax
import jax.numpy as jnp
from jax.experimental import pallas as pl
from jax.experimental.pallas import tpu as pltpu

EPS = 1e-5  # nn.LayerNorm default


def _round_up(x, m):
    return ((x + m - 1) // m) * m


def _vmem_capacity_bytes():
    try:
        info = pltpu.get_tpu_info()
        cap = int(getattr(info, "vmem_capacity_bytes", 0))
        if cap > 0:
            return cap
    except Exception:
        pass
    return 128 * 1024 * 1024  # v5e / v6e default


def prenorm_kernel(x_ref, g_ref, b_ref, w_ref, bias_ref, o_ref, y_ref):
    # Grid = (row-tile i, dim_out-tile j); j is innermost ("arbitrary").
    # LayerNorm runs once per row tile (j == 0) and its result is cached in
    # the y_ref VMEM scratch (MXU-feed dtype); all j steps only feed the MXU.
    @pl.when(pl.program_id(1) == 0)
    def _():
        x = x_ref[...].astype(jnp.float32)
        mean = jnp.mean(x, axis=-1, keepdims=True)
        xc = x - mean
        var = jnp.mean(xc * xc, axis=-1, keepdims=True)   # biased var (PyTorch LN)
        inv = jax.lax.rsqrt(var + EPS)
        # gamma/beta are pre-cast to f32 once in the wrapper.
        y = (xc * inv) * g_ref[...] + b_ref[...]
        y_ref[...] = y.astype(y_ref.dtype)

    out = jnp.dot(y_ref[...], w_ref[...], preferred_element_type=jnp.float32)
    o_ref[...] = (out + bias_ref[...]).astype(o_ref.dtype)


def prenorm_linear(x, gamma, beta, w, bias, *, use_bf16_mxu=False):
    """PreNorm with fn = Linear: (LayerNorm(x) @ W + b).

    x: (B, S, dim); gamma/beta: (dim,); w: (dim, dim_out); bias: (dim_out,).
    """
    B, S, dim = x.shape
    dim_out = w.shape[1]
    rows = B * S

    # Optional bf16 MXU operands (f32 accumulation) — numerics knob.
    w_mxu = w.astype(jnp.bfloat16) if (use_bf16_mxu and w.dtype == jnp.float32) else w

    x_bytes = jnp.dtype(x.dtype).itemsize
    w_bytes = jnp.dtype(w_mxu.dtype).itemsize
    out_bytes = x_bytes

    vmem_cap = _vmem_capacity_bytes()
    budget = int(0.85 * vmem_cap)
    small_vmem = vmem_cap < (100 << 20)   # v7x: 64 MiB / TensorCore

    # Row tile: multiple of the sublane pack, clamped to the workload.  Smaller
    # on v7x for very wide dims so the x tile + f32 LN temporaries fit 64 MiB.
    pack = 16 if x_bytes < 4 else 8
    tm_default = 128 if (small_vmem and dim >= 4096) else 256
    tm = max(pack, min(tm_default, _round_up(rows, pack)))

    def vmem_need(tm_, tn_):
        return (2 * tm_ * dim * x_bytes        # double-buffered x tiles
                + 2 * dim * tn_ * w_bytes      # double-buffered W tiles
                + 2 * tm_ * tn_ * out_bytes    # double-buffered out tiles
                + tm_ * dim * w_bytes          # cached normalized activations
                + 3 * tm_ * dim * 4            # f32 LN temporaries
                + tm_ * tn_ * 4                # f32 matmul accumulator
                + 4 * (2 * dim + 2 * tn_))     # f32 gamma/beta/bias tiles

    # Column tile: lane-dense (multiple of 128).  On 128 MiB chips let it grow
    # (fewer j steps, less W re-streaming); cap at 256 on v7x.
    if dim_out < 128:
        tn = dim_out
    else:
        dim_out_128 = _round_up(dim_out, 128)
        cands = [128, 256]
        if not small_vmem:
            cands += [512, dim_out_128]
        cands = sorted({c for c in cands if c <= dim_out_128}, reverse=True)
        tn = 128
        for c in cands:
            if vmem_need(tm, c) <= budget:
                tn = c
                break

    dim_out_p = _round_up(dim_out, tn)

    # Only the (static) weight/bias get padded so W-tile reads are clean; x is
    # NOT padded and the output is NOT sliced — ragged boundary blocks are
    # masked by Pallas, and row-wise LN keeps garbage rows isolated.
    w_p, bias_p = w_mxu, bias
    if dim_out_p != dim_out:
        w_p = jnp.pad(w_mxu, ((0, 0), (0, dim_out_p - dim_out)))
        bias_p = jnp.pad(bias, ((0, dim_out_p - dim_out),))

    x2 = x.reshape(rows, dim)
    g2 = gamma.reshape(1, dim).astype(jnp.float32)
    b2 = beta.reshape(1, dim).astype(jnp.float32)
    bias2 = bias_p.reshape(1, dim_out_p).astype(jnp.float32)

    grid = (pl.cdiv(rows, tm), dim_out_p // tn)

    vmem_limit = int(min(max(vmem_need(tm, tn) + (1 << 20), 32 << 20), budget))

    out = pl.pallas_call(
        prenorm_kernel,
        out_shape=jax.ShapeDtypeStruct((rows, dim_out), x.dtype),
        grid_spec=pltpu.PrefetchScalarGridSpec(
            num_scalar_prefetch=0,
            grid=grid,
            in_specs=[
                pl.BlockSpec((tm, dim), lambda i, j: (i, 0)),    # x row tile
                pl.BlockSpec((1, dim), lambda i, j: (0, 0)),     # gamma (f32)
                pl.BlockSpec((1, dim), lambda i, j: (0, 0)),     # beta  (f32)
                pl.BlockSpec((dim, tn), lambda i, j: (0, j)),    # W tile (MXU dtype)
                pl.BlockSpec((1, tn), lambda i, j: (0, j)),      # bias tile (f32)
            ],
            out_specs=pl.BlockSpec((tm, tn), lambda i, j: (i, j)),
            scratch_shapes=[pltpu.VMEM((tm, dim), w_mxu.dtype)],  # cached LN(x)
        ),
        compiler_params=pltpu.CompilerParams(
            # j reuses the per-row-tile LN scratch -> "arbitrary"; i is
            # megacore-parallel.
            dimension_semantics=("parallel", "arbitrary"),
            vmem_limit_bytes=vmem_limit),
    )(x2, g2, b2, w_p, bias2)

    return out.reshape(B, S, dim_out)


def prenorm_linear_ref(x, gamma, beta, w, bias):
    xf = x.astype(jnp.float32)
    mean = jnp.mean(xf, axis=-1, keepdims=True)
    var = jnp.mean((xf - mean) ** 2, axis=-1, keepdims=True)
    xn = (xf - mean) * jax.lax.rsqrt(var + EPS)
    y = xn * gamma + beta
    return (y @ w.astype(jnp.float32) + bias).astype(x.dtype)


if __name__ == "__main__":
    B, S, dim = 2, 8, 32
    key = jax.random.PRNGKey(0)
    kx, kg, kb, kw, kbi = jax.random.split(key, 5)

    x = jax.random.normal(kx, (B, S, dim), dtype=jnp.float32)
    # LayerNorm defaults (gamma=1, beta=0), perturbed so the affine path is exercised.
    gamma = jnp.ones((dim,), jnp.float32) + 0.01 * jax.random.normal(kg, (dim,))
    beta = 0.01 * jax.random.normal(kb, (dim,))
    w = jax.random.normal(kw, (dim, dim), dtype=jnp.float32) * (1.0 / dim ** 0.5)
    bias = 0.01 * jax.random.normal(kbi, (dim,))

    out = prenorm_linear(x, gamma, beta, w, bias)
    out = jax.block_until_ready(out)

    ref = prenorm_linear_ref(x, gamma, beta, w, bias)
    assert out.shape == (B, S, dim)
    assert jnp.allclose(out, ref, atol=1e-4, rtol=1e-4)
    print("KERNEL_OK")
</pallas_src>

<mosaic_0001>
module attributes {stable_mosaic.version = 11 : i64} {
  func.func @prenorm_kernel(%arg0: i32, %arg1: i32, %arg2: memref<16x32xf32, #tpu.memory_space<vmem>>, %arg3: memref<1x32xf32, #tpu.memory_space<vmem>>, %arg4: memref<1x32xf32, #tpu.memory_space<vmem>>, %arg5: memref<32x32xf32, #tpu.memory_space<vmem>>, %arg6: memref<1x32xf32, #tpu.memory_space<vmem>>, %arg7: memref<16x32xf32, #tpu.memory_space<vmem>>, %arg8: memref<16x32xf32, #tpu.memory_space<vmem>>) attributes {dimension_semantics = [#tpu.dimension_semantics<parallel>, #tpu.dimension_semantics<arbitrary>], iteration_bounds = array<i64: 1, 1>, scalar_prefetch = 0 : i64, scratch_operands = 1 : i64, tpu.core_type = #tpu.core_type<tc>, window_params = [{transform_indices = @transform_0, window_bounds = array<i64: 16, 32>}, {pipeline_mode = #tpu.pipeline_mode<synchronous>, transform_indices = @transform_1, window_bounds = array<i64: 1, 32>}, {pipeline_mode = #tpu.pipeline_mode<synchronous>, transform_indices = @transform_2, window_bounds = array<i64: 1, 32>}, {transform_indices = @transform_3, window_bounds = array<i64: 32, 32>}, {transform_indices = @transform_4, window_bounds = array<i64: 1, 32>}, {transform_indices = @transform_5, window_bounds = array<i64: 16, 32>}]} {
    %c0_i32 = arith.constant 0 : i32
    %0 = arith.cmpi eq, %arg1, %c0_i32 : i32
    %1 = arith.extui %0 : i1 to i32
    %c0_i32_0 = arith.constant 0 : i32
    %2 = arith.cmpi ne, %1, %c0_i32_0 : i32
    scf.if %2 {
      %c0_8 = arith.constant 0 : index
      %c0_9 = arith.constant 0 : index
      %10 = vector.load %arg2[%c0_8, %c0_9] : memref<16x32xf32, #tpu.memory_space<vmem>>, vector<16x32xf32>
      %cst_10 = arith.constant dense<0.000000e+00> : vector<16xf32>
      %11 = vector.multi_reduction <add>, %10, %cst_10 [1] : vector<16x32xf32> to vector<16xf32>
      %12 = vector.shape_cast %11 : vector<16xf32> to vector<16x1xf32>
      %cst_11 = arith.constant 3.200000e+01 : f32
      %13 = vector.broadcast %cst_11 : f32 to vector<16x1xf32>
      %14 = arith.divf %12, %13 : vector<16x1xf32>
      %15 = vector.broadcast %14 : vector<16x1xf32> to vector<16x32xf32>
      %16 = arith.subf %10, %15 : vector<16x32xf32>
      %17 = arith.mulf %16, %16 : vector<16x32xf32>
      %cst_12 = arith.constant dense<0.000000e+00> : vector<16xf32>
      %18 = vector.multi_reduction <add>, %17, %cst_12 [1] : vector<16x32xf32> to vector<16xf32>
      %19 = vector.shape_cast %18 : vector<16xf32> to vector<16x1xf32>
      %cst_13 = arith.constant 3.200000e+01 : f32
      %20 = vector.broadcast %cst_13 : f32 to vector<16x1xf32>
      %21 = arith.divf %19, %20 : vector<16x1xf32>
      %cst_14 = arith.constant 9.99999974E-6 : f32
      %22 = vector.broadcast %cst_14 : f32 to vector<16x1xf32>
      %23 = arith.addf %21, %22 : vector<16x1xf32>
      %24 = math.rsqrt %23 : vector<16x1xf32>
      %25 = vector.broadcast %24 : vector<16x1xf32> to vector<16x32xf32>
      %26 = arith.mulf %16, %25 : vector<16x32xf32>
      %c0_15 = arith.constant 0 : index
      %c0_16 = arith.constant 0 : index
      %27 = vector.load %arg3[%c0_15, %c0_16] : memref<1x32xf32, #tpu.memory_space<vmem>>, vector<1x32xf32>
      %28 = vector.broadcast %27 : vector<1x32xf32> to vector<16x32xf32>
      %29 = arith.mulf %26, %28 : vector<16x32xf32>
      %c0_17 = arith.constant 0 : index
      %c0_18 = arith.constant 0 : index
      %30 = vector.load %arg4[%c0_17, %c0_18] : memref<1x32xf32, #tpu.memory_space<vmem>>, vector<1x32xf32>
      %31 = vector.broadcast %30 : vector<1x32xf32> to vector<16x32xf32>
      %32 = arith.addf %29, %31 : vector<16x32xf32>
      %c0_19 = arith.constant 0 : index
      %c0_20 = arith.constant 0 : index
      %33 = vector.load %arg8[%c0_19, %c0_20] : memref<16x32xf32, #tpu.memory_space<vmem>>, vector<16x32xf32>
      tpu.vector_store %arg8[%c0_19, %c0_20], %32 {strides = array<i32>} : memref<16x32xf32, #tpu.memory_space<vmem>>, vector<16x32xf32>,
    } else {
    }
    %c0 = arith.constant 0 : index
    %c0_1 = arith.constant 0 : index
    %3 = vector.load %arg8[%c0, %c0_1] : memref<16x32xf32, #tpu.memory_space<vmem>>, vector<16x32xf32>
    %c0_2 = arith.constant 0 : index
    %c0_3 = arith.constant 0 : index
    %4 = vector.load %arg5[%c0_2, %c0_3] : memref<32x32xf32, #tpu.memory_space<vmem>>, vector<32x32xf32>
    %cst = arith.constant dense<0.000000e+00> : vector<16x32xf32>
    %5 = tpu.matmul %3, %4, %cst {dimension_numbers = #tpu.dot_dimension_numbers<[1], [0], [0], [1], [0, 0, 1, 1], [], []>} : vector<16x32xf32>, vector<32x32xf32>, vector<16x32xf32> -> vector<16x32xf32>
    %c0_4 = arith.constant 0 : index
    %c0_5 = arith.constant 0 : index
    %6 = vector.load %arg6[%c0_4, %c0_5] : memref<1x32xf32, #tpu.memory_space<vmem>>, vector<1x32xf32>
    %7 = vector.broadcast %6 : vector<1x32xf32> to vector<16x32xf32>
    %8 = arith.addf %5, %7 : vector<16x32xf32>
    %c0_6 = arith.constant 0 : index
    %c0_7 = arith.constant 0 : index
    %9 = vector.load %arg7[%c0_6, %c0_7] : memref<16x32xf32, #tpu.memory_space<vmem>>, vector<16x32xf32>
    tpu.vector_store %arg7[%c0_6, %c0_7], %8 {strides = array<i32>} : memref<16x32xf32, #tpu.memory_space<vmem>>, vector<16x32xf32>,
    return
  }
  func.func @transform_0(%arg0: i32, %arg1: i32) -> (i32, i32) {
    %c0_i32 = arith.constant 0 : i32
    %c0_i32_0 = arith.constant 0 : i32
    return %arg0, %c0_i32 : i32, i32
  }
  func.func @transform_1(%arg0: i32, %arg1: i32) -> (i32, i32) {
    %c0_i32 = arith.constant 0 : i32
    %c0_i32_0 = arith.constant 0 : i32
    %c0_i32_1 = arith.constant 0 : i32
    return %c0_i32, %c0_i32_0 : i32, i32
  }
  func.func @transform_2(%arg0: i32, %arg1: i32) -> (i32, i32) {
    %c0_i32 = arith.constant 0 : i32
    %c0_i32_0 = arith.constant 0 : i32
    %c0_i32_1 = arith.constant 0 : i32
    return %c0_i32, %c0_i32_0 : i32, i32
  }
  func.func @transform_3(%arg0: i32, %arg1: i32) -> (i32, i32) {
    %c0_i32 = arith.constant 0 : i32
    %c0_i32_0 = arith.constant 0 : i32
    return %c0_i32, %arg1 : i32, i32
  }
  func.func @transform_4(%arg0: i32, %arg1: i32) -> (i32, i32) {
    %c0_i32 = arith.constant 0 : i32
    %c0_i32_0 = arith.constant 0 : i32
    return %c0_i32, %arg1 : i32, i32
  }
  func.func @transform_5(%arg0: i32, %arg1: i32) -> (i32, i32) {
    %c0_i32 = arith.constant 0 : i32
    return %arg0, %arg1 : i32, i32
  }
}

</mosaic_0001>

<llo_original>
// kernel: tpu_custom_call.1
$region0: #{tpu_custom_call.1}
  #allocation0 [shape = 'u32[]', space=smem, size = 0x4, offset = 0x4, fixed_abs, tag = 'smem constant byte address 0x4 - core index']
  #allocation1 [shape = 'u32[144,128]{1,0:T(1,128)}', space=vmem, size = 0x12000, scoped, tag = 'internal scratch']
  #allocation2 [shape = 'f32[16,32]{1,0:T(8,128)}', space=vmem, size = 0x2000, scoped, tag = 'scratch operand']
  %s0 = inlined_call_operand.hbm [shape: f32[16,32], index: 0, kind: input, shape index: {}]
  %s1 = inlined_call_operand.vmem [shape: f32[1,32], index: 1, kind: input, shape index: {}]
  %s2 = inlined_call_operand.vmem [shape: f32[1,32], index: 2, kind: input, shape index: {}]
  %s3 = inlined_call_operand.hbm [shape: f32[32,32], index: 3, kind: input, shape index: {}]
  %s4 = inlined_call_operand.vmem [shape: f32[1,32], index: 4, kind: input, shape index: {}]
  %s5 = inlined_call_operand.hbm [shape: f32[16,32], index: 5, kind: output, shape index: {}]
  %s6 = sld [smem:[#allocation0]]
  $region42: #{tpu_custom_call.1} parent=0
    _
  %s8 = ssub.s32 1, %s6
  %s9 = scalar_select 0, %s8, %s6
  $region1: #{tpu_custom_call.1} parent=0
    #allocation3 [shape = 'u8[8192]{0}', space=vmem, size = 0x2000, scoped, tag = 'input window, operand 0, single buffered']
    #allocation4 [shape = 's32[1]{0}', space=sflag, size = 0x4, scoped, tag = 'scoped memory for tpu_custom_call.1']
    #allocation5 [shape = 's32[1]{0}', space=sflag, size = 0x4, scoped, tag = 'scoped memory for tpu_custom_call.1']
    #allocation6 [shape = 'u8[16384]{0}', space=vmem, size = 0x4000, scoped, tag = 'input window, operand 3, single buffered']
    #allocation7 [shape = 's32[1]{0}', space=sflag, size = 0x4, scoped, tag = 'scoped memory for tpu_custom_call.1']
    #allocation8 [shape = 'u8[8192]{0}', space=vmem, size = 0x2000, scoped, tag = 'output window, operand 0, single buffered']
    %10 = vsyncpa [#allocation4], 0
    %11 = vsyncpa [#allocation7], 0
    %12 = vsyncpa [#allocation5], 0
    // Predicated region
    $region2: #{tpu_custom_call.1} parent=1 // pred_check
      _
    $region3: #{tpu_custom_call.1} parent=1 // pred_check_branch
      %14 = sbr.rel (0) target = $region5
    $region4: #{tpu_custom_call.1} parent=1 // pred_region
      %s16 = ssub.s32 256, 256
      %17 = vsyncadd [#allocation4], %s16
      %s18 = sshll.u32 [#allocation3], 4
      %s19 = int_to_ptr.vmem [resolvable:$true] %s18
      %24 = dma.hbm_to_vmem [thread:$0]  %s0, 256, %s19, [#allocation4], 128, 128, 8
    $region5: #{tpu_custom_call.1} parent=1 // pred_fallthru
      _
    // Predicated region
    $region6: #{tpu_custom_call.1} parent=1 // pred_check
      _
    $region7: #{tpu_custom_call.1} parent=1 // pred_check_branch
      %26 = sbr.rel (0) target = $region9
    $region8: #{tpu_custom_call.1} parent=1 // pred_region
      _
    $region9: #{tpu_custom_call.1} parent=1 // pred_fallthru
      _
    // Predicated region
    $region10: #{tpu_custom_call.1} parent=1 // pred_check
      _
    $region11: #{tpu_custom_call.1} parent=1 // pred_check_branch
      %28 = sbr.rel (0) target = $region13
    $region12: #{tpu_custom_call.1} parent=1 // pred_region
      _
    $region13: #{tpu_custom_call.1} parent=1 // pred_fallthru
      _
    // Predicated region
    $region14: #{tpu_custom_call.1} parent=1 // pred_check
      _
    $region15: #{tpu_custom_call.1} parent=1 // pred_check_branch
      %30 = sbr.rel (0) target = $region17
    $region16: #{tpu_custom_call.1} parent=1 // pred_region
      %s32 = ssub.s32 512, 512
      %33 = vsyncadd [#allocation7], %s32
      %s34 = sshll.u32 [#allocation6], 4
      %s35 = int_to_ptr.vmem [resolvable:$true] %s34
      %40 = dma.hbm_to_vmem [thread:$0]  %s3, 512, %s35, [#allocation7], 128, 128, 8
    $region17: #{tpu_custom_call.1} parent=1 // pred_fallthru
      _
    // Predicated region
    $region18: #{tpu_custom_call.1} parent=1 // pred_check
      _
    $region19: #{tpu_custom_call.1} parent=1 // pred_check_branch
      %42 = sbr.rel (0) target = $region21
    $region20: #{tpu_custom_call.1} parent=1 // pred_region
      _
    $region21: #{tpu_custom_call.1} parent=1 // pred_fallthru
      _
    // Predicated region
    $region22: #{tpu_custom_call.1} parent=1 // pred_check
      _
    $region23: #{tpu_custom_call.1} parent=1 // pred_check_branch
      %44 = sbr.rel (0) target = $region25
    $region24: #{tpu_custom_call.1} parent=1 // pred_region
      %45 = dma.done [#allocation4], 256
    $region25: #{tpu_custom_call.1} parent=1 // pred_fallthru
      _
    // Predicated region
    $region26: #{tpu_custom_call.1} parent=1 // pred_check
      _
    $region27: #{tpu_custom_call.1} parent=1 // pred_check_branch
      %47 = sbr.rel (0) target = $region29
    $region28: #{tpu_custom_call.1} parent=1 // pred_region
      %48 = dma.done [#allocation7], 512
    $region29: #{tpu_custom_call.1} parent=1 // pred_fallthru
      _
    %p49 = scmp.eq.s32.totalorder 0, 0
    // Predicated region
    $region30: #{tpu_custom_call.1} parent=1 // pred_check
      %p50 = pneg %p49
    $region31: #{tpu_custom_call.1} parent=1 // pred_check_branch
      %52 = sbr.rel (%p50) target = $region33
    $region32: #{tpu_custom_call.1} parent=1 // pred_region
      %v53 = vld [vmem:[#allocation3] sm:$0xff]
      %v54 = vld [vmem:[#allocation3 + $0x8] sm:$0xff]
      %vm55 = vcmask 261120
      %v56 = vsel %vm55, %v53, 0.0
      %57 = vadd.xlane.f32.xlu0 %v56
      %v58 = vpop.xlane.xlu0 %57
      %v59 = vsel %vm55, %v54, 0.0
      %60 = vadd.xlane.f32.xlu0 %v59
      %v61 = vpop.xlane.xlu0 %60
      %v62 = vrcp.pop 32.0
      %v63 = vmul.f32 %v58, %v62
      %v64 = vmul.f32 %v61, %v62
      %v65 = vsub.f32 %v53, %v63
      %v66 = vsub.f32 %v54, %v64
      %v67 = vmul.f32 %v65, %v65
      %v68 = vmul.f32 %v66, %v66
      %v69 = vsel %vm55, %v67, 0.0
      %70 = vadd.xlane.f32.xlu0 %v69
      %v71 = vpop.xlane.xlu0 %70
      %v72 = vsel %vm55, %v68, 0.0
      %73 = vadd.xlane.f32.xlu0 %v72
      %v74 = vpop.xlane.xlu0 %73
      %v75 = vmul.f32 %v71, %v62
      %v76 = vmul.f32 %v74, %v62
      %v77 = vadd.f32 %v75, 1e-05
      %v78 = vadd.f32 %v76, 1e-05
      %v79 = vrsqrt.pop %v77
      %v80 = vrsqrt.pop %v78
      %v81 = vmul.f32 %v65, %v79
      %v82 = vmul.f32 %v66, %v80
      %v83 = vld [vmem:[%s1] sm:$0x1]
      %v85 = vlaneseq
      %v86 = vshrl.u32 %v85, 7
      %v87 = vsub.s32 0, %v86
      %v88 = vrot.slane %v83, %v87
      %v90 = vmul.f32 %v81, %v88
      %v91 = vmul.f32 %v82, %v88
      %v92 = vld [vmem:[%s2] sm:$0x1]
      %v94 = vlaneseq
      %v95 = vshrl.u32 %v94, 7
      %v96 = vsub.s32 0, %v95
      %v97 = vrot.slane %v92, %v96
      %v99 = vadd.f32 %v90, %v97
      %v100 = vadd.f32 %v91, %v97
      %101 = vst.msk [vmem:[#allocation2] sm:$0xff] %vm55, %v99
      %102 = vst.msk [vmem:[#allocation2 + $0x8] sm:$0xff] %vm55, %v100
    $region33: #{tpu_custom_call.1} parent=1 // pred_fallthru
      _
    %v103 = vld [vmem:[#allocation2] sm:$0xff]
    %v104 = vld [vmem:[#allocation2 + $0x8] sm:$0xff]
    %v105 = vld [vmem:[#allocation6] sm:$0xff]
    %v106 = vld [vmem:[#allocation6 + $0x8] sm:$0xff]
    %v107 = vld [vmem:[#allocation6 + $0x10] sm:$0xff]
    %v108 = vld [vmem:[#allocation6 + $0x18] sm:$0xff]
    %v109 = vld [vmem:[%s4] sm:$0x1]
    %v111 = vlaneseq
    %v112 = vshrl.u32 %v111, 7
    %v113 = vsub.s32 0, %v112
    %v114 = vrot.slane %v109, %v113
    %vm116 = vcmask 261120
    %v118 = vsel %vm116, %v103, 0
    %v121 = vsel %vm116, %v104, 0
    %123 = vmatprep.subr.mxu0 0.0
    %124 = vmatpush1.msra.mxu0 %v105
    %125 = vmatprep.subr.mxu0 0.0
    %126 = vmatpush1.msra.mxu0 %v106
    %127 = vmatprep.subr.mxu0 0.0
    %128 = vmatpush1.msra.mxu0 %v107
    %129 = vmatprep.subr.mxu0 0.0
    %130 = vmatpush1.msra.mxu0 %v108
    %131 = vmatprep.subr.mxu0 0.0
    %132 = vmatpush1.msra.mxu0 0.0
    %133 = vmatprep.subr.mxu0 0.0
    %134 = vmatpush1.msra.mxu0 0.0
    %135 = vmatprep.subr.mxu0 0.0
    %136 = vmatpush1.msra.mxu0 0.0
    %137 = vmatprep.subr.mxu0 0.0
    %138 = vmatpush1.msra.mxu0 0.0
    %139 = vmatprep.subr.mxu0 0.0
    %140 = vmatpush1.msra.mxu0 0.0
    %141 = vmatprep.subr.mxu0 0.0
    %142 = vmatpush1.msra.mxu0 0.0
    %143 = vmatprep.subr.mxu0 0.0
    %144 = vmatpush1.msra.mxu0 0.0
    %145 = vmatprep.subr.mxu0 0.0
    %146 = vmatpush1.msra.mxu0 0.0
    %147 = vmatprep.subr.mxu0 0.0
    %148 = vmatpush1.msra.mxu0 0.0
    %149 = vmatprep.subr.mxu0 0.0
    %150 = vmatpush1.msra.mxu0 0.0
    %151 = vmatprep.subr.mxu0 0.0
    %152 = vmatpush1.msra.mxu0 0.0
    %153 = vmatprep.subr.mxu0 0.0
    %154 = vmatpush1.msra.mxu0 0.0
    %155 = vmatprep.subr.mxu0 0.0
    %156 = vmatpush1.msra.mxu0 0.0
    %157 = vmatprep.subr.mxu0 0.0
    %158 = vmatpush1.msra.mxu0 0.0
    %159 = vmatprep.subr.mxu0 0.0
    %160 = vmatpush1.msra.mxu0 0.0
    %161 = vmatprep.subr.mxu0 0.0
    %162 = vmatpush1.msra.mxu0 0.0
    %163 = vmatprep.subr.mxu0 0.0
    %164 = vmatpush1.msra.mxu0 0.0
    %165 = vmatprep.subr.mxu0 0.0
    %166 = vmatpush1.msra.mxu0 0.0
    %167 = vmatprep.subr.mxu0 0.0
    %168 = vmatpush1.msra.mxu0 0.0
    %169 = vmatprep.subr.mxu0 0.0
    %170 = vmatpush1.msra.mxu0 0.0
    %171 = vmatprep.subr.mxu0 0.0
    %172 = vmatpush1.msra.mxu0 0.0
    %173 = vmatprep.subr.mxu0 0.0
    %174 = vmatpush1.msra.mxu0 0.0
    %175 = vmatprep.subr.mxu0 0.0
    %176 = vmatpush1.msra.mxu0 0.0
    %177 = vmatprep.subr.mxu0 0.0
    %178 = vmatpush1.msra.mxu0 0.0
    %179 = vmatprep.subr.mxu0 0.0
    %180 = vmatpush1.msra.mxu0 0.0
    %181 = vmatprep.subr.mxu0 0.0
    %182 = vmatpush1.msra.mxu0 0.0
    %183 = vmatprep.subr.mxu0 0.0
    %184 = vmatpush1.msra.mxu0 0.0
    %185 = vmatprep.subr.mxu0 0.0
    %186 = vmatpush1.msra.mxu0 0.0
    %187 = vmatprep.mubr.f32.mxu0 0.0
    %188 = vmatmul.mubr.f32.gmra.mrb[0].mxu0 %v118
    %v189 = vpop.f32.mrb[0].mxu0
    %v190 = vadd.f32 %v114, %v189
    %v191 = vpop.f32.mrb[0].mxu0
    %192 = vmatprep.mubr.f32.mxu0 0.0
    %193 = vmatmul.mubr.f32.gmra.mrb[0].mxu0 %v121
    %v194 = vpop.f32.mrb[0].mxu0
    %v195 = vadd.f32 %v114, %v194
    %v196 = vpop.f32.mrb[0].mxu0
    %197 = vdwg.mxu0
    %198 = vst.msk [vmem:[#allocation8] sm:$0xff] %vm116, %v190
    %199 = vst.msk [vmem:[#allocation8 + $0x8] sm:$0xff] %vm116, %v195
    // Predicated region
    $region34: #{tpu_custom_call.1} parent=1 // pred_check
      _
    $region35: #{tpu_custom_call.1} parent=1 // pred_check_branch
      %201 = sbr.rel (0) target = $region37
    $region36: #{tpu_custom_call.1} parent=1 // pred_region
      %s203 = ssub.s32 256, 256
      %204 = vsyncadd [#allocation5], %s203
      %s205 = sshll.u32 [#allocation8], 4
      %s206 = int_to_ptr.vmem [resolvable:$true] %s205
      %211 = dma.vmem_to_hbm [thread:$0]  %s206, 256, %s5, [#allocation5], 128, 128, 8
    $region37: #{tpu_custom_call.1} parent=1 // pred_fallthru
      _
    // Predicated region
    $region38: #{tpu_custom_call.1} parent=1 // pred_check
      _
    $region39: #{tpu_custom_call.1} parent=1 // pred_check_branch
      %213 = sbr.rel (0) target = $region41
    $region40: #{tpu_custom_call.1} parent=1 // pred_region
      %214 = dma.done [#allocation5], 256
    $region41: #{tpu_custom_call.1} parent=1 // pred_fallthru
      _
    %215 = vsyncpa [#allocation4], 1
    %216 = vsyncpa [#allocation7], 1
    %217 = vsyncpa [#allocation5], 1

</llo_original>
